<compile_context>
chip_gen: v7x
topology: tpu7x:2x2x1
jax: 0.10.0
libtpu: 0.0.40
codegen_flags: <defaults>
</compile_context>

<pallas_src>
import math
import jax
import jax.numpy as jnp
from jax.experimental import pallas as pl
from jax.experimental.pallas import tpu as pltpu

LN_EPS = 1e-5  # torch.nn.LayerNorm default


# ------------------------------ helpers ------------------------------------ #
def _round_up(x, m):
    return (x + m - 1) // m * m


def _balanced_tile(n, max_tile, mult=8):
    """Largest tile (multiple of `mult`, <= ~max_tile) that minimizes padding.

    Returns (tile, num_blocks); tile * num_blocks >= n with at most one
    near-`mult` worth of padding per block (avoids the ~2x blowup at sizes just
    above a tile boundary, e.g. N=520 -> tile=264, pad=528 instead of 1024).
    """
    n = max(int(n), 1)
    cap = max(mult, min(int(max_tile), _round_up(n, mult)))
    n_blocks = -(-n // cap)
    tile = _round_up(-(-n // n_blocks), mult)
    return tile, n_blocks


# -------------------------- node-path Pallas kernel ------------------------- #
def _node_mlp_ln_kernel(x_ref, w1_ref, b1_ref, w2_ref, b2_ref, w3_ref, b3_ref,
                        g_ref, bt_ref, o_ref):
    # x / w* arrive as bf16 (MXU-native); accumulate + bias/ReLU/LN in f32.
    h = jnp.dot(x_ref[...], w1_ref[...], preferred_element_type=jnp.float32)
    h = jnp.maximum(h + b1_ref[...], 0.0)
    h = jnp.dot(h.astype(jnp.bfloat16), w2_ref[...],
                preferred_element_type=jnp.float32)
    h = jnp.maximum(h + b2_ref[...], 0.0)
    h = jnp.dot(h.astype(jnp.bfloat16), w3_ref[...],
                preferred_element_type=jnp.float32)
    h = h + b3_ref[...]
    mean = jnp.mean(h, axis=-1, keepdims=True)
    var = jnp.mean(jnp.square(h - mean), axis=-1, keepdims=True)
    h = (h - mean) * jax.lax.rsqrt(var + LN_EPS)
    o_ref[...] = (h * g_ref[...] + bt_ref[...]).astype(o_ref.dtype)


def mlp_layernorm(x, prep, *, max_tile_m=512):
    """x: [M, d_in] f32 -> [M, H] f32 through Linear/ReLU x2, Linear, LayerNorm."""
    M, d_in = x.shape
    H = prep["hidden"]
    k_pad = prep["k_pad"]

    tile_m, nm = _balanced_tile(M, max_tile_m)
    m_pad = tile_m * nm

    # Build the padded (m_pad, k_pad) input in one shot (no zeros().at[].set()).
    x_p = jnp.pad(x.astype(jnp.bfloat16),
                  ((0, m_pad - M), (0, k_pad - d_in)))

    def rep(shape):
        return pl.BlockSpec(shape, lambda i: (0, 0))

    out = pl.pallas_call(
        _node_mlp_ln_kernel,
        out_shape=jax.ShapeDtypeStruct((m_pad, H), jnp.float32),
        grid=(nm,),
        in_specs=[
            pl.BlockSpec((tile_m, k_pad), lambda i: (i, 0)),
            rep((k_pad, H)), rep((1, H)),
            rep((H, H)), rep((1, H)),
            rep((H, H)), rep((1, H)),
            rep((1, H)), rep((1, H)),
        ],
        out_specs=pl.BlockSpec((tile_m, H), lambda i: (i, 0)),
        compiler_params=pltpu.CompilerParams(
            dimension_semantics=("parallel",)),
    )(x_p, prep["w1"], prep["b1"], prep["w2"], prep["b2"],
      prep["w3"], prep["b3"], prep["gamma"], prep["beta"])
    return out[:M] if m_pad != M else out


# -------------------------- edge-path Pallas kernel ------------------------- #
def _edge_mlp_ln_kernel(a_ref, u_ref, c_ref, v_ref, wr_ref, w2_ref, b2_ref,
                        w3_ref, b3_ref, g_ref, bt_ref, o_ref):
    # a_ref/u_ref: (1, ti, H)/(1, ti, kr) per-i tile (f32);
    # c_ref/v_ref: (1, tj, H)/(1, tj, kr) per-j tile (f32).
    # Pairwise rel-position embedding @ W1_rel == (u_i * v_j) @ w_rel (trig
    # identities), so the 98-wide cross-concat input never exists in HBM.
    ti = a_ref.shape[1]
    tj = c_ref.shape[1]
    H = a_ref.shape[2]
    kr = u_ref.shape[2]

    a = a_ref[0]                                   # (ti, H)   bias folded in
    u = u_ref[0]                                   # (ti, kr)
    c = c_ref[0]                                   # (tj, H)
    v = v_ref[0]                                   # (tj, kr)

    rel = (u[:, None, :] * v[None, :, :]).reshape(ti * tj, kr)
    h = jnp.dot(rel.astype(jnp.bfloat16), wr_ref[...],
                preferred_element_type=jnp.float32)          # (ti*tj, H)
    h = h + (a[:, None, :] + c[None, :, :]).reshape(ti * tj, H)
    h = jnp.maximum(h, 0.0)
    h = jnp.dot(h.astype(jnp.bfloat16), w2_ref[...],
                preferred_element_type=jnp.float32)
    h = jnp.maximum(h + b2_ref[...], 0.0)
    h = jnp.dot(h.astype(jnp.bfloat16), w3_ref[...],
                preferred_element_type=jnp.float32)
    h = h + b3_ref[...]
    mean = jnp.mean(h, axis=-1, keepdims=True)
    var = jnp.mean(jnp.square(h - mean), axis=-1, keepdims=True)
    h = (h - mean) * jax.lax.rsqrt(var + LN_EPS)
    h = h * g_ref[...] + bt_ref[...]
    o_ref[...] = h.reshape(o_ref.shape).astype(o_ref.dtype)


def edge_embedder_fused(prot_t_embed, seq_idx, prep, *,
                        tile_i=16, tile_j=512, out_dtype=jnp.bfloat16):
    """Fused edge path: each grid step processes a (ti x tj) tile of (i, j).

    edge_in row (b,i,j) = [prot_t[b,i] | prot_t[b,j] | idx_emb(s_i - s_j)].
    W1 is split accordingly: A[b,i] = prot_t[b,i] @ W1_left + b1 and
    C[b,j] = prot_t[b,j] @ W1_right are per-residue precomputes; the rel-pos
    term uses sin(p-q) / cos(p-q) identities to become (U_i * V_j) @ W_rel.
    """
    B, N, _ = prot_t_embed.shape
    H = prep["hidden"]
    half = prep["freq"].shape[0]
    kr = 4 * half

    # tiny per-residue precomputes, O(B*N*H), kept in f32 for accuracy
    a_pre = prot_t_embed @ prep["w1_left"] + prep["b1"]      # (B, N, H)
    c_pre = prot_t_embed @ prep["w1_right"]                  # (B, N, H)

    phase = seq_idx.astype(jnp.float32)[..., None] * prep["freq"]   # (B,N,half)
    s, c = jnp.sin(phase), jnp.cos(phase)
    u = jnp.concatenate([s, c, c, s], axis=-1)               # (B, N, kr)
    v = jnp.concatenate([c, -s, c, s], axis=-1)              # (B, N, kr)

    ti, ni = _balanced_tile(N, tile_i)
    tj, nj = _balanced_tile(N, tile_j)
    ni_pad, nj_pad = ti * ni, tj * nj

    def pad_i(arr):
        return jnp.pad(arr, ((0, 0), (0, ni_pad - N), (0, 0)))

    def pad_j(arr):
        return jnp.pad(arr, ((0, 0), (0, nj_pad - N), (0, 0)))

    a_in, u_in = pad_i(a_pre), pad_i(u)
    c_in, v_in = pad_j(c_pre), pad_j(v)

    if nj == 1:
        # common case (N <= tile_j): drop the degenerate j grid axis
        grid = (B, ni)
        im_a = lambda b, i: (b, i, 0)
        im_c = lambda b, i: (b, 0, 0)
        im_w = lambda b, i: (0, 0)
        im_o = lambda b, i: (b, i, 0, 0)
        sem = ("parallel", "parallel")
    else:
        grid = (B, ni, nj)
        im_a = lambda b, i, j: (b, i, 0)
        im_c = lambda b, i, j: (b, j, 0)
        im_w = lambda b, i, j: (0, 0)
        im_o = lambda b, i, j: (b, i, j, 0)
        sem = ("parallel", "parallel", "parallel")

    out = pl.pallas_call(
        _edge_mlp_ln_kernel,
        out_shape=jax.ShapeDtypeStruct((B, ni_pad, nj_pad, H), out_dtype),
        grid=grid,
        in_specs=[
            pl.BlockSpec((1, ti, H), im_a),     # A[b, i-tile] (bias folded in)
            pl.BlockSpec((1, ti, kr), im_a),    # U[b, i-tile]
            pl.BlockSpec((1, tj, H), im_c),     # C[b, j-tile]
            pl.BlockSpec((1, tj, kr), im_c),    # V[b, j-tile]
            pl.BlockSpec((kr, H), im_w),        # w_rel
            pl.BlockSpec((H, H), im_w), pl.BlockSpec((1, H), im_w),   # w2, b2
            pl.BlockSpec((H, H), im_w), pl.BlockSpec((1, H), im_w),   # w3, b3
            pl.BlockSpec((1, H), im_w), pl.BlockSpec((1, H), im_w),   # gamma, beta
        ],
        out_specs=pl.BlockSpec((1, ti, tj, H), im_o),
        compiler_params=pltpu.CompilerParams(dimension_semantics=sem),
    )(a_in, u_in, c_in, v_in, prep["w_rel"],
      prep["w2"], prep["b2"], prep["w3"], prep["b3"],
      prep["gamma"], prep["beta"])

    if ni_pad != N or nj_pad != N:
        out = out[:, :N, :N, :]
    return out


# ------------------------ one-time parameter prep --------------------------- #
def prepare_params(params, *, index_embed_size, max_len=2056):
    """Hoists per-call weight prep (splits, bf16 casts, K padding) out of the
    forward pass; call once per model."""
    half = index_embed_size // 2
    d1 = index_embed_size + 1                      # prot_t_embed width

    # node embedder
    w1, b1, w2, b2, w3, b3, g, bt = params["node"]
    d_in, H = w1.shape
    k_pad = _round_up(d_in, 128)
    node = dict(
        w1=jnp.pad(w1.astype(jnp.bfloat16), ((0, k_pad - d_in), (0, 0))),
        b1=b1, w2=w2.astype(jnp.bfloat16), b2=b2,
        w3=w3.astype(jnp.bfloat16), b3=b3, gamma=g, beta=bt,
        k_pad=k_pad, d_in=d_in, hidden=H,
    )

    # edge embedder: split W1's K axis as [left prot_t | right prot_t | sin | cos]
    w1, b1, w2, b2, w3, b3, g, bt = params["edge"]
    H = w1.shape[1]
    w_sin = w1[2 * d1:2 * d1 + half]
    w_cos = w1[2 * d1 + half:2 * d1 + 2 * half]
    k = jnp.arange(half, dtype=jnp.float32)
    freq = (math.pi / (max_len ** (2.0 * k / index_embed_size))).astype(
        jnp.float32)
    edge = dict(
        w1_left=w1[:d1], w1_right=w1[d1:2 * d1], b1=b1,
        w_rel=jnp.concatenate([w_sin, w_sin, w_cos, w_cos],
                              axis=0).astype(jnp.bfloat16),
        w2=w2.astype(jnp.bfloat16), b2=b2,
        w3=w3.astype(jnp.bfloat16), b3=b3, gamma=g, beta=bt,
        freq=freq, hidden=H,
    )
    return {"node": node, "edge": edge}


# ----------------------------- plain-JAX glue -------------------------------- #
def get_timestep_embedding(timesteps, embedding_dim, max_positions=10000):
    assert timesteps.ndim == 1
    timesteps = timesteps * max_positions
    half_dim = embedding_dim // 2
    emb = math.log(max_positions) / (half_dim - 1)
    emb = jnp.exp(jnp.arange(half_dim, dtype=jnp.float32) * -emb)
    emb = timesteps.astype(jnp.float32)[:, None] * emb[None, :]
    emb = jnp.concatenate([jnp.sin(emb), jnp.cos(emb)], axis=1)
    # embedding_dim is even in this script, so no F.pad branch needed
    return emb


def get_index_embedding(indices, embed_size, max_len=2056):
    K = jnp.arange(embed_size // 2, dtype=jnp.float32)
    arg = indices[..., None].astype(jnp.float32) * math.pi / (
        max_len ** (2.0 * K[None] / embed_size))
    return jnp.concatenate([jnp.sin(arg), jnp.cos(arg)], axis=-1)


def cross_concat(feats_1d, num_batch, num_res):
    a = jnp.tile(feats_1d[:, :, None, :], (1, 1, num_res, 1))
    b = jnp.tile(feats_1d[:, None, :, :], (1, num_res, 1, 1))
    return jnp.concatenate([a, b], axis=-1).astype(jnp.float32).reshape(
        num_batch, num_res * num_res, -1)


def init_mlp_ln(key, d_in, d_out):
    """Deterministic nn.Linear-style init (uniform +- 1/sqrt(fan_in))."""
    ks = jax.random.split(key, 6)

    def lin(kw, kb, fan_in, fan_out):
        lim = 1.0 / math.sqrt(fan_in)
        w = jax.random.uniform(kw, (fan_in, fan_out), jnp.float32, -lim, lim)
        b = jax.random.uniform(kb, (1, fan_out), jnp.float32, -lim, lim)
        return w, b

    w1, b1 = lin(ks[0], ks[1], d_in, d_out)
    w2, b2 = lin(ks[2], ks[3], d_out, d_out)
    w3, b3 = lin(ks[4], ks[5], d_out, d_out)
    gamma = jnp.ones((1, d_out), jnp.float32)
    beta = jnp.zeros((1, d_out), jnp.float32)
    return (w1, b1, w2, b2, w3, b3, gamma, beta)


def embedder_forward(prepared, *, seq_idx, t, fixed_mask, self_conditioning_ca,
                     index_embed_size, edge_out_dtype=jnp.bfloat16):
    num_batch, num_res = seq_idx.shape
    fixed_mask = fixed_mask[..., None].astype(jnp.float32)

    prot_t_embed = jnp.tile(
        get_timestep_embedding(t, index_embed_size)[:, None, :],
        (1, num_res, 1))
    prot_t_embed = jnp.concatenate([prot_t_embed, fixed_mask], axis=-1)

    # TODO(synk): embed_self_conditioning=False in this config, so the
    # du.calc_distogram pair feature (not provided) is not appended.
    del self_conditioning_ca

    # node path: [prot_t_embed | index_embed(seq)] -> fused MLP+LN kernel
    node_in = jnp.concatenate(
        [prot_t_embed, get_index_embedding(seq_idx, index_embed_size)],
        axis=-1).astype(jnp.float32)
    node_embed = mlp_layernorm(
        node_in.reshape(num_batch * num_res, -1), prepared["node"])
    node_embed = node_embed.reshape(num_batch, num_res, -1)

    # edge path: cross-concat + rel-position embedding fused in-kernel
    edge_embed = edge_embedder_fused(
        prot_t_embed, seq_idx, prepared["edge"], out_dtype=edge_out_dtype)
    return node_embed, edge_embed


# pure-JAX f32 reference of the MLP+LayerNorm head (for correctness check)
def mlp_layernorm_ref(x, params):
    w1, b1, w2, b2, w3, b3, g, bt = params
    h = jnp.maximum(x @ w1 + b1, 0.0)
    h = jnp.maximum(h @ w2 + b2, 0.0)
    h = h @ w3 + b3
    mean = jnp.mean(h, axis=-1, keepdims=True)
    var = jnp.mean(jnp.square(h - mean), axis=-1, keepdims=True)
    return (h - mean) * jax.lax.rsqrt(var + LN_EPS) * g + bt


if __name__ == "__main__":
    # synthetic config (embed_self_conditioning = False)
    index_embed_size = 32
    node_embed_size = 64
    edge_embed_size = 64
    t_embed_size = index_embed_size
    node_embed_dims = t_embed_size + 1 + index_embed_size            # 65
    edge_in_dims = (t_embed_size + 1) * 2 + index_embed_size         # 98

    B, N = 2, 8
    key = jax.random.PRNGKey(0)
    k_node, k_edge, k_t, k_mask, k_ca = jax.random.split(key, 5)

    params = {
        "node": init_mlp_ln(k_node, node_embed_dims, node_embed_size),
        "edge": init_mlp_ln(k_edge, edge_in_dims, edge_embed_size),
    }
    prepared = prepare_params(params, index_embed_size=index_embed_size)

    seq_idx = jnp.tile(jnp.arange(N, dtype=jnp.int32)[None, :], (B, 1))
    t = jax.random.uniform(k_t, (B,), jnp.float32)
    fixed_mask = (jax.random.uniform(k_mask, (B, N)) > 0.5).astype(jnp.float32)
    self_conditioning_ca = jax.random.normal(k_ca, (B, N, 3), jnp.float32)

    node_embed, edge_embed = embedder_forward(
        prepared, seq_idx=seq_idx, t=t, fixed_mask=fixed_mask,
        self_conditioning_ca=self_conditioning_ca,
        index_embed_size=index_embed_size)
    jax.block_until_ready((node_embed, edge_embed))

    assert node_embed.shape == (B, N, node_embed_size)
    assert edge_embed.shape == (B, N, N, edge_embed_size)

    # correctness check against an f32 reference of the original module math.
    # Kernels feed the MXU bf16 operands (f32 accumulation) and emit the edge
    # output in bf16, hence the relaxed tolerance vs a pure-f32 reference.
    prot_t = jnp.tile(get_timestep_embedding(t, index_embed_size)[:, None, :],
                      (1, N, 1))
    prot_t = jnp.concatenate([prot_t, fixed_mask[..., None]], axis=-1)
    node_in = jnp.concatenate(
        [prot_t, get_index_embedding(seq_idx, index_embed_size)], axis=-1)
    rel = (seq_idx[:, :, None] - seq_idx[:, None, :]).reshape(B, N * N)
    edge_in = jnp.concatenate(
        [cross_concat(prot_t, B, N), get_index_embedding(rel, index_embed_size)],
        axis=-1)
    node_ref = mlp_layernorm_ref(node_in.reshape(B * N, -1),
                                 params["node"]).reshape(B, N, -1)
    edge_ref = mlp_layernorm_ref(edge_in.reshape(B * N * N, -1),
                                 params["edge"]).reshape(B, N, N, -1)

    assert not jnp.any(jnp.isnan(node_embed)) and not jnp.any(jnp.isnan(edge_embed))
    assert jnp.allclose(node_embed, node_ref, atol=3e-2, rtol=3e-2)
    assert jnp.allclose(edge_embed.astype(jnp.float32), edge_ref,
                        atol=3e-2, rtol=3e-2)
    print("KERNEL_OK")
</pallas_src>

<mosaic_0001>
module attributes {stable_mosaic.version = 11 : i64} {
  func.func @_node_mlp_ln_kernel(%arg0: i32, %arg1: memref<16x128xbf16, #tpu.memory_space<vmem>>, %arg2: memref<128x64xbf16, #tpu.memory_space<vmem>>, %arg3: memref<1x64xf32, #tpu.memory_space<vmem>>, %arg4: memref<64x64xbf16, #tpu.memory_space<vmem>>, %arg5: memref<1x64xf32, #tpu.memory_space<vmem>>, %arg6: memref<64x64xbf16, #tpu.memory_space<vmem>>, %arg7: memref<1x64xf32, #tpu.memory_space<vmem>>, %arg8: memref<1x64xf32, #tpu.memory_space<vmem>>, %arg9: memref<1x64xf32, #tpu.memory_space<vmem>>, %arg10: memref<16x64xf32, #tpu.memory_space<vmem>>) attributes {dimension_semantics = [#tpu.dimension_semantics<parallel>], iteration_bounds = array<i64: 1>, scalar_prefetch = 0 : i64, scratch_operands = 0 : i64, tpu.core_type = #tpu.core_type<tc>, window_params = [{transform_indices = @transform_0, window_bounds = array<i64: 16, 128>}, {pipeline_mode = #tpu.pipeline_mode<synchronous>, transform_indices = @transform_1, window_bounds = array<i64: 128, 64>}, {pipeline_mode = #tpu.pipeline_mode<synchronous>, transform_indices = @transform_2, window_bounds = array<i64: 1, 64>}, {pipeline_mode = #tpu.pipeline_mode<synchronous>, transform_indices = @transform_3, window_bounds = array<i64: 64, 64>}, {pipeline_mode = #tpu.pipeline_mode<synchronous>, transform_indices = @transform_4, window_bounds = array<i64: 1, 64>}, {pipeline_mode = #tpu.pipeline_mode<synchronous>, transform_indices = @transform_5, window_bounds = array<i64: 64, 64>}, {pipeline_mode = #tpu.pipeline_mode<synchronous>, transform_indices = @transform_6, window_bounds = array<i64: 1, 64>}, {pipeline_mode = #tpu.pipeline_mode<synchronous>, transform_indices = @transform_7, window_bounds = array<i64: 1, 64>}, {pipeline_mode = #tpu.pipeline_mode<synchronous>, transform_indices = @transform_8, window_bounds = array<i64: 1, 64>}, {transform_indices = @transform_9, window_bounds = array<i64: 16, 64>}]} {
    %c0 = arith.constant 0 : index
    %c0_0 = arith.constant 0 : index
    %0 = vector.load %arg1[%c0, %c0_0] : memref<16x128xbf16, #tpu.memory_space<vmem>>, vector<16x128xbf16>
    %c0_1 = arith.constant 0 : index
    %c0_2 = arith.constant 0 : index
    %1 = vector.load %arg2[%c0_1, %c0_2] : memref<128x64xbf16, #tpu.memory_space<vmem>>, vector<128x64xbf16>
    %cst = arith.constant dense<0.000000e+00> : vector<16x64xf32>
    %2 = tpu.matmul %0, %1, %cst {dimension_numbers = #tpu.dot_dimension_numbers<[1], [0], [0], [1], [0, 0, 1, 1], [], []>} : vector<16x128xbf16>, vector<128x64xbf16>, vector<16x64xf32> -> vector<16x64xf32>
    %c0_3 = arith.constant 0 : index
    %c0_4 = arith.constant 0 : index
    %3 = vector.load %arg3[%c0_3, %c0_4] : memref<1x64xf32, #tpu.memory_space<vmem>>, vector<1x64xf32>
    %4 = vector.broadcast %3 : vector<1x64xf32> to vector<16x64xf32>
    %5 = arith.addf %2, %4 : vector<16x64xf32>
    %cst_5 = arith.constant 0.000000e+00 : f32
    %6 = vector.broadcast %cst_5 : f32 to vector<16x64xf32>
    %7 = arith.maximumf %5, %6 : vector<16x64xf32>
    %8 = arith.truncf %7 : vector<16x64xf32> to vector<16x64xbf16>
    %c0_6 = arith.constant 0 : index
    %c0_7 = arith.constant 0 : index
    %9 = vector.load %arg4[%c0_6, %c0_7] : memref<64x64xbf16, #tpu.memory_space<vmem>>, vector<64x64xbf16>
    %cst_8 = arith.constant dense<0.000000e+00> : vector<16x64xf32>
    %10 = tpu.matmul %8, %9, %cst_8 {dimension_numbers = #tpu.dot_dimension_numbers<[1], [0], [0], [1], [0, 0, 1, 1], [], []>} : vector<16x64xbf16>, vector<64x64xbf16>, vector<16x64xf32> -> vector<16x64xf32>
    %c0_9 = arith.constant 0 : index
    %c0_10 = arith.constant 0 : index
    %11 = vector.load %arg5[%c0_9, %c0_10] : memref<1x64xf32, #tpu.memory_space<vmem>>, vector<1x64xf32>
    %12 = vector.broadcast %11 : vector<1x64xf32> to vector<16x64xf32>
    %13 = arith.addf %10, %12 : vector<16x64xf32>
    %cst_11 = arith.constant 0.000000e+00 : f32
    %14 = vector.broadcast %cst_11 : f32 to vector<16x64xf32>
    %15 = arith.maximumf %13, %14 : vector<16x64xf32>
    %16 = arith.truncf %15 : vector<16x64xf32> to vector<16x64xbf16>
    %c0_12 = arith.constant 0 : index
    %c0_13 = arith.constant 0 : index
    %17 = vector.load %arg6[%c0_12, %c0_13] : memref<64x64xbf16, #tpu.memory_space<vmem>>, vector<64x64xbf16>
    %cst_14 = arith.constant dense<0.000000e+00> : vector<16x64xf32>
    %18 = tpu.matmul %16, %17, %cst_14 {dimension_numbers = #tpu.dot_dimension_numbers<[1], [0], [0], [1], [0, 0, 1, 1], [], []>} : vector<16x64xbf16>, vector<64x64xbf16>, vector<16x64xf32> -> vector<16x64xf32>
    %c0_15 = arith.constant 0 : index
    %c0_16 = arith.constant 0 : index
    %19 = vector.load %arg7[%c0_15, %c0_16] : memref<1x64xf32, #tpu.memory_space<vmem>>, vector<1x64xf32>
    %20 = vector.broadcast %19 : vector<1x64xf32> to vector<16x64xf32>
    %21 = arith.addf %18, %20 : vector<16x64xf32>
    %cst_17 = arith.constant dense<0.000000e+00> : vector<16xf32>
    %22 = vector.multi_reduction <add>, %21, %cst_17 [1] : vector<16x64xf32> to vector<16xf32>
    %23 = vector.shape_cast %22 : vector<16xf32> to vector<16x1xf32>
    %cst_18 = arith.constant 6.400000e+01 : f32
    %24 = vector.broadcast %cst_18 : f32 to vector<16x1xf32>
    %25 = arith.divf %23, %24 : vector<16x1xf32>
    %26 = vector.broadcast %25 : vector<16x1xf32> to vector<16x64xf32>
    %27 = arith.subf %21, %26 : vector<16x64xf32>
    %28 = arith.mulf %27, %27 : vector<16x64xf32>
    %cst_19 = arith.constant dense<0.000000e+00> : vector<16xf32>
    %29 = vector.multi_reduction <add>, %28, %cst_19 [1] : vector<16x64xf32> to vector<16xf32>
    %30 = vector.shape_cast %29 : vector<16xf32> to vector<16x1xf32>
    %cst_20 = arith.constant 6.400000e+01 : f32
    %31 = vector.broadcast %cst_20 : f32 to vector<16x1xf32>
    %32 = arith.divf %30, %31 : vector<16x1xf32>
    %33 = vector.broadcast %25 : vector<16x1xf32> to vector<16x64xf32>
    %34 = arith.subf %21, %33 : vector<16x64xf32>
    %cst_21 = arith.constant 9.99999974E-6 : f32
    %35 = vector.broadcast %cst_21 : f32 to vector<16x1xf32>
    %36 = arith.addf %32, %35 : vector<16x1xf32>
    %37 = math.rsqrt %36 : vector<16x1xf32>
    %38 = vector.broadcast %37 : vector<16x1xf32> to vector<16x64xf32>
    %39 = arith.mulf %34, %38 : vector<16x64xf32>
    %c0_22 = arith.constant 0 : index
    %c0_23 = arith.constant 0 : index
    %40 = vector.load %arg8[%c0_22, %c0_23] : memref<1x64xf32, #tpu.memory_space<vmem>>, vector<1x64xf32>
    %41 = vector.broadcast %40 : vector<1x64xf32> to vector<16x64xf32>
    %42 = arith.mulf %39, %41 : vector<16x64xf32>
    %c0_24 = arith.constant 0 : index
    %c0_25 = arith.constant 0 : index
    %43 = vector.load %arg9[%c0_24, %c0_25] : memref<1x64xf32, #tpu.memory_space<vmem>>, vector<1x64xf32>
    %44 = vector.broadcast %43 : vector<1x64xf32> to vector<16x64xf32>
    %45 = arith.addf %42, %44 : vector<16x64xf32>
    %c0_26 = arith.constant 0 : index
    %c0_27 = arith.constant 0 : index
    %46 = vector.load %arg10[%c0_26, %c0_27] : memref<16x64xf32, #tpu.memory_space<vmem>>, vector<16x64xf32>
    tpu.vector_store %arg10[%c0_26, %c0_27], %45 {strides = array<i32>} : memref<16x64xf32, #tpu.memory_space<vmem>>, vector<16x64xf32>,
    return
  }
  func.func @transform_0(%arg0: i32) -> (i32, i32) {
    %c0_i32 = arith.constant 0 : i32
    %c0_i32_0 = arith.constant 0 : i32
    return %arg0, %c0_i32 : i32, i32
  }
  func.func @transform_1(%arg0: i32) -> (i32, i32) {
    %c0_i32 = arith.constant 0 : i32
    %c0_i32_0 = arith.constant 0 : i32
    %c0_i32_1 = arith.constant 0 : i32
    return %c0_i32, %c0_i32_0 : i32, i32
  }
  func.func @transform_2(%arg0: i32) -> (i32, i32) {
    %c0_i32 = arith.constant 0 : i32
    %c0_i32_0 = arith.constant 0 : i32
    %c0_i32_1 = arith.constant 0 : i32
    return %c0_i32, %c0_i32_0 : i32, i32
  }
  func.func @transform_3(%arg0: i32) -> (i32, i32) {
    %c0_i32 = arith.constant 0 : i32
    %c0_i32_0 = arith.constant 0 : i32
    %c0_i32_1 = arith.constant 0 : i32
    return %c0_i32, %c0_i32_0 : i32, i32
  }
  func.func @transform_4(%arg0: i32) -> (i32, i32) {
    %c0_i32 = arith.constant 0 : i32
    %c0_i32_0 = arith.constant 0 : i32
    %c0_i32_1 = arith.constant 0 : i32
    return %c0_i32, %c0_i32_0 : i32, i32
  }
  func.func @transform_5(%arg0: i32) -> (i32, i32) {
    %c0_i32 = arith.constant 0 : i32
    %c0_i32_0 = arith.constant 0 : i32
    %c0_i32_1 = arith.constant 0 : i32
    return %c0_i32, %c0_i32_0 : i32, i32
  }
  func.func @transform_6(%arg0: i32) -> (i32, i32) {
    %c0_i32 = arith.constant 0 : i32
    %c0_i32_0 = arith.constant 0 : i32
    %c0_i32_1 = arith.constant 0 : i32
    return %c0_i32, %c0_i32_0 : i32, i32
  }
  func.func @transform_7(%arg0: i32) -> (i32, i32) {
    %c0_i32 = arith.constant 0 : i32
    %c0_i32_0 = arith.constant 0 : i32
    %c0_i32_1 = arith.constant 0 : i32
    return %c0_i32, %c0_i32_0 : i32, i32
  }
  func.func @transform_8(%arg0: i32) -> (i32, i32) {
    %c0_i32 = arith.constant 0 : i32
    %c0_i32_0 = arith.constant 0 : i32
    %c0_i32_1 = arith.constant 0 : i32
    return %c0_i32, %c0_i32_0 : i32, i32
  }
  func.func @transform_9(%arg0: i32) -> (i32, i32) {
    %c0_i32 = arith.constant 0 : i32
    %c0_i32_0 = arith.constant 0 : i32
    return %arg0, %c0_i32 : i32, i32
  }
}

</mosaic_0001>

<llo_original>
// kernel: tpu_custom_call.1
$region0: #{tpu_custom_call.1}
  #allocation0 [shape = 'u32[]', space=smem, size = 0x4, offset = 0x4, fixed_abs, tag = 'smem constant byte address 0x4 - core index']
  #allocation1 [shape = 'u32[144,128]{1,0:T(1,128)}', space=vmem, size = 0x12000, scoped, tag = 'internal scratch']
  %s0 = inlined_call_operand.vmem [shape: bf16[16,128], index: 0, kind: input, shape index: {}]
  %s1 = inlined_call_operand.vmem [shape: bf16[128,64], index: 1, kind: input, shape index: {}]
  %s2 = inlined_call_operand.vmem [shape: f32[1,64], index: 2, kind: input, shape index: {}]
  %s3 = inlined_call_operand.vmem [shape: bf16[64,64], index: 3, kind: input, shape index: {}]
  %s4 = inlined_call_operand.vmem [shape: f32[1,64], index: 4, kind: input, shape index: {}]
  %s5 = inlined_call_operand.vmem [shape: bf16[64,64], index: 5, kind: input, shape index: {}]
  %s6 = inlined_call_operand.vmem [shape: f32[1,64], index: 6, kind: input, shape index: {}]
  %s7 = inlined_call_operand.vmem [shape: f32[1,64], index: 7, kind: input, shape index: {}]
  %s8 = inlined_call_operand.vmem [shape: f32[1,64], index: 8, kind: input, shape index: {}]
  %s9 = inlined_call_operand.hbm [shape: f32[16,64], index: 9, kind: output, shape index: {}]
  %s10 = sld [smem:[#allocation0]]
  $region46: #{tpu_custom_call.1} parent=0
    _
  %s12 = ssub.s32 1, %s10
  %s13 = scalar_select 0, %s12, %s10
  $region1: #{tpu_custom_call.1} parent=0
    #allocation2 [shape = 'u8[8192]{0}', space=vmem, size = 0x2000, scoped, tag = 'output window, operand 0, single buffered']
    #allocation3 [shape = 's32[1]{0}', space=sflag, size = 0x4, scoped, tag = 'scoped memory for tpu_custom_call.1']
    %14 = vsyncpa [#allocation3], 0
    // Predicated region
    $region2: #{tpu_custom_call.1} parent=1 // pred_check
      _
    $region3: #{tpu_custom_call.1} parent=1 // pred_check_branch
      %16 = sbr.rel (0) target = $region5
    $region4: #{tpu_custom_call.1} parent=1 // pred_region
      _
    $region5: #{tpu_custom_call.1} parent=1 // pred_fallthru
      _
    // Predicated region
    $region6: #{tpu_custom_call.1} parent=1 // pred_check
      _
    $region7: #{tpu_custom_call.1} parent=1 // pred_check_branch
      %18 = sbr.rel (0) target = $region9
    $region8: #{tpu_custom_call.1} parent=1 // pred_region
      _
    $region9: #{tpu_custom_call.1} parent=1 // pred_fallthru
      _
    // Predicated region
    $region10: #{tpu_custom_call.1} parent=1 // pred_check
      _
    $region11: #{tpu_custom_call.1} parent=1 // pred_check_branch
      %20 = sbr.rel (0) target = $region13
    $region12: #{tpu_custom_call.1} parent=1 // pred_region
      _
    $region13: #{tpu_custom_call.1} parent=1 // pred_fallthru
      _
    // Predicated region
    $region14: #{tpu_custom_call.1} parent=1 // pred_check
      _
    $region15: #{tpu_custom_call.1} parent=1 // pred_check_branch
      %22 = sbr.rel (0) target = $region17
    $region16: #{tpu_custom_call.1} parent=1 // pred_region
      _
    $region17: #{tpu_custom_call.1} parent=1 // pred_fallthru
      _
    // Predicated region
    $region18: #{tpu_custom_call.1} parent=1 // pred_check
      _
    $region19: #{tpu_custom_call.1} parent=1 // pred_check_branch
      %24 = sbr.rel (0) target = $region21
    $region20: #{tpu_custom_call.1} parent=1 // pred_region
      _
    $region21: #{tpu_custom_call.1} parent=1 // pred_fallthru
      _
    // Predicated region
    $region22: #{tpu_custom_call.1} parent=1 // pred_check
      _
    $region23: #{tpu_custom_call.1} parent=1 // pred_check_branch
      %26 = sbr.rel (0) target = $region25
    $region24: #{tpu_custom_call.1} parent=1 // pred_region
      _
    $region25: #{tpu_custom_call.1} parent=1 // pred_fallthru
      _
    // Predicated region
    $region26: #{tpu_custom_call.1} parent=1 // pred_check
      _
    $region27: #{tpu_custom_call.1} parent=1 // pred_check_branch
      %28 = sbr.rel (0) target = $region29
    $region28: #{tpu_custom_call.1} parent=1 // pred_region
      _
    $region29: #{tpu_custom_call.1} parent=1 // pred_fallthru
      _
    // Predicated region
    $region30: #{tpu_custom_call.1} parent=1 // pred_check
      _
    $region31: #{tpu_custom_call.1} parent=1 // pred_check_branch
      %30 = sbr.rel (0) target = $region33
    $region32: #{tpu_custom_call.1} parent=1 // pred_region
      _
    $region33: #{tpu_custom_call.1} parent=1 // pred_fallthru
      _
    // Predicated region
    $region34: #{tpu_custom_call.1} parent=1 // pred_check
      _
    $region35: #{tpu_custom_call.1} parent=1 // pred_check_branch
      %32 = sbr.rel (0) target = $region37
    $region36: #{tpu_custom_call.1} parent=1 // pred_region
      _
    $region37: #{tpu_custom_call.1} parent=1 // pred_fallthru
      _
    %v34 = vld [vmem:[%s0] sm:$0xf]
    %v35 = vld [vmem:[%s0 + $0x4] sm:$0xf]
    %v36 = vld [vmem:[%s1] sm:$0xf]
    %v37 = vld [vmem:[%s1 + $0x4] sm:$0xf]
    %v38 = vld [vmem:[%s1 + $0x8] sm:$0xf]
    %v39 = vld [vmem:[%s1 + $0xc] sm:$0xf]
    %v40 = vld [vmem:[%s1 + $0x10] sm:$0xf]
    %v41 = vld [vmem:[%s1 + $0x14] sm:$0xf]
    %v42 = vld [vmem:[%s1 + $0x18] sm:$0xf]
    %v43 = vld [vmem:[%s1 + $0x1c] sm:$0xf]
    %v44 = vld [vmem:[%s1 + $0x20] sm:$0xf]
    %v45 = vld [vmem:[%s1 + $0x24] sm:$0xf]
    %v46 = vld [vmem:[%s1 + $0x28] sm:$0xf]
    %v47 = vld [vmem:[%s1 + $0x2c] sm:$0xf]
    %v48 = vld [vmem:[%s1 + $0x30] sm:$0xf]
    %v49 = vld [vmem:[%s1 + $0x34] sm:$0xf]
    %v50 = vld [vmem:[%s1 + $0x38] sm:$0xf]
    %v51 = vld [vmem:[%s1 + $0x3c] sm:$0xf]
    %v52 = vld [vmem:[%s2] sm:$0x1]
    %v54 = vlaneseq
    %v55 = vshrl.u32 %v54, 7
    %v56 = vsub.s32 0, %v55
    %v57 = vrot.slane %v52, %v56
    %v61 = vunpack.c.l.b16 %v34
    %v62 = vunpack.c.l.b16 %v35
    %v63 = vpack.c.b16 %v62, %v61
    %v81 = vunpack.c.l.b16 %v36
    %v82 = vunpack.c.l.b16 %v37
    %v83 = vunpack.c.l.b16 %v38
    %v84 = vunpack.c.l.b16 %v39
    %v85 = vunpack.c.l.b16 %v40
    %v86 = vunpack.c.l.b16 %v41
    %v87 = vunpack.c.l.b16 %v42
    %v88 = vunpack.c.l.b16 %v43
    %v89 = vunpack.c.l.b16 %v44
    %v90 = vunpack.c.l.b16 %v45
    %v91 = vunpack.c.l.b16 %v46
    %v92 = vunpack.c.l.b16 %v47
    %v93 = vunpack.c.l.b16 %v48
    %v94 = vunpack.c.l.b16 %v49
    %v95 = vunpack.c.l.b16 %v50
    %v96 = vunpack.c.l.b16 %v51
    %v97 = vpack.c.b16 %v82, %v81
    %v98 = vpack.c.b16 %v84, %v83
    %v99 = vpack.c.b16 %v86, %v85
    %v100 = vpack.c.b16 %v88, %v87
    %v101 = vpack.c.b16 %v90, %v89
    %v102 = vpack.c.b16 %v92, %v91
    %v103 = vpack.c.b16 %v94, %v93
    %v104 = vpack.c.b16 %v96, %v95
    %113 = vmatprep.subr.bf16.mxu0 0
    %114 = vmatpush1.bf16.msra.mxu0 %v97
    %115 = vmatprep.subr.bf16.mxu0 0
    %116 = vmatpush1.bf16.msra.mxu0 %v98
    %117 = vmatprep.subr.bf16.mxu0 0
    %118 = vmatpush1.bf16.msra.mxu0 %v99
    %119 = vmatprep.subr.bf16.mxu0 0
    %120 = vmatpush1.bf16.msra.mxu0 %v100
    %121 = vmatprep.subr.bf16.mxu0 0
    %122 = vmatpush1.bf16.msra.mxu0 %v101
    %123 = vmatprep.subr.bf16.mxu0 0
    %124 = vmatpush1.bf16.msra.mxu0 %v102
    %125 = vmatprep.subr.bf16.mxu0 0
    %126 = vmatpush1.bf16.msra.mxu0 %v103
    %127 = vmatprep.subr.bf16.mxu0 0
    %128 = vmatpush1.bf16.msra.mxu0 %v104
    %129 = vmatprep.subr.bf16.mxu0 0
    %130 = vmatpush1.bf16.msra.mxu0 0
    %131 = vmatprep.subr.bf16.mxu0 0
    %132 = vmatpush1.bf16.msra.mxu0 0
    %133 = vmatprep.subr.bf16.mxu0 0
    %134 = vmatpush1.bf16.msra.mxu0 0
    %135 = vmatprep.subr.bf16.mxu0 0
    %136 = vmatpush1.bf16.msra.mxu0 0
    %137 = vmatprep.subr.bf16.mxu0 0
    %138 = vmatpush1.bf16.msra.mxu0 0
    %139 = vmatprep.subr.bf16.mxu0 0
    %140 = vmatpush1.bf16.msra.mxu0 0
    %141 = vmatprep.subr.bf16.mxu0 0
    %142 = vmatpush1.bf16.msra.mxu0 0
    %143 = vmatprep.subr.bf16.mxu0 0
    %144 = vmatpush1.bf16.msra.mxu0 0
    %145 = vmatprep.mubr.bf16.mxu0 0
    %146 = vmatmul.mubr.bf16.gmra.mrb[0].mxu0 %v63
    %v147 = vpop.f32.mrb[0].mxu0
    %v148 = vadd.f32 %v57, %v147
    %v149 = vpop.f32.mrb[0].mxu0
    %v150 = vpop.f32.mrb[0].mxu0
    %v151 = vadd.f32 %v57, %v150
    %v152 = vpop.f32.mrb[0].mxu0
    %153 = vdwg.mxu0
    %v154 = vmax.f32 %v148, 0.0
    %v155 = vmax.f32 %v151, 0.0
    %v156 = vpack.c.bf16 %v155, %v154
    %v157 = vld [vmem:[%s3] sm:$0xf]
    %v158 = vld [vmem:[%s3 + $0x4] sm:$0xf]
    %v159 = vld [vmem:[%s3 + $0x8] sm:$0xf]
    %v160 = vld [vmem:[%s3 + $0xc] sm:$0xf]
    %v161 = vld [vmem:[%s3 + $0x10] sm:$0xf]
    %v162 = vld [vmem:[%s3 + $0x14] sm:$0xf]
    %v163 = vld [vmem:[%s3 + $0x18] sm:$0xf]
    %v164 = vld [vmem:[%s3 + $0x1c] sm:$0xf]
    %v165 = vld [vmem:[%s4] sm:$0x1]
    %v167 = vlaneseq
    %v168 = vshrl.u32 %v167, 7
    %v169 = vsub.s32 0, %v168
    %v170 = vrot.slane %v165, %v169
    %v180 = vunpack.c.l.b16 %v157
    %v181 = vunpack.c.l.b16 %v158
    %v182 = vunpack.c.l.b16 %v159
    %v183 = vunpack.c.l.b16 %v160
    %v184 = vunpack.c.l.b16 %v161
    %v185 = vunpack.c.l.b16 %v162
    %v186 = vunpack.c.l.b16 %v163
    %v187 = vunpack.c.l.b16 %v164
    %v188 = vpack.c.b16 %v181, %v180
    %v189 = vpack.c.b16 %v183, %v182
    %v190 = vpack.c.b16 %v185, %v184
    %v191 = vpack.c.b16 %v187, %v186
    %vm196 = vcmask 523264
    %v198 = vsel %vm196, %v156, 0
    %200 = vmatprep.subr.bf16.mxu0 0
    %201 = vmatpush1.bf16.msra.mxu0 %v188
    %202 = vmatprep.subr.bf16.mxu0 0
    %203 = vmatpush1.bf16.msra.mxu0 %v189
    %204 = vmatprep.subr.bf16.mxu0 0
    %205 = vmatpush1.bf16.msra.mxu0 %v190
    %206 = vmatprep.subr.bf16.mxu0 0
    %207 = vmatpush1.bf16.msra.mxu0 %v191
    %208 = vmatprep.subr.bf16.mxu0 0
    %209 = vmatpush1.bf16.msra.mxu0 0
    %210 = vmatprep.subr.bf16.mxu0 0
    %211 = vmatpush1.bf16.msra.mxu0 0
    %212 = vmatprep.subr.bf16.mxu0 0
    %213 = vmatpush1.bf16.msra.mxu0 0
    %214 = vmatprep.subr.bf16.mxu0 0
    %215 = vmatpush1.bf16.msra.mxu0 0
    %216 = vmatprep.subr.bf16.mxu0 0
    %217 = vmatpush1.bf16.msra.mxu0 0
    %218 = vmatprep.subr.bf16.mxu0 0
    %219 = vmatpush1.bf16.msra.mxu0 0
    %220 = vmatprep.subr.bf16.mxu0 0
    %221 = vmatpush1.bf16.msra.mxu0 0
    %222 = vmatprep.subr.bf16.mxu0 0
    %223 = vmatpush1.bf16.msra.mxu0 0
    %224 = vmatprep.subr.bf16.mxu0 0
    %225 = vmatpush1.bf16.msra.mxu0 0
    %226 = vmatprep.subr.bf16.mxu0 0
    %227 = vmatpush1.bf16.msra.mxu0 0
    %228 = vmatprep.subr.bf16.mxu0 0
    %229 = vmatpush1.bf16.msra.mxu0 0
    %230 = vmatprep.subr.bf16.mxu0 0
    %231 = vmatpush1.bf16.msra.mxu0 0
    %232 = vmatprep.mubr.bf16.mxu0 0
    %233 = vmatmul.mubr.bf16.gmra.mrb[0].mxu0 %v198
    %v234 = vpop.f32.mrb[0].mxu0
    %v235 = vadd.f32 %v170, %v234
    %v236 = vpop.f32.mrb[0].mxu0
    %v237 = vpop.f32.mrb[0].mxu0
    %v238 = vadd.f32 %v170, %v237
    %v239 = vpop.f32.mrb[0].mxu0
    %240 = vdwg.mxu0
    %v241 = vmax.f32 %v235, 0.0
    %v242 = vmax.f32 %v238, 0.0
    %v243 = vpack.c.bf16 %v242, %v241
    %v244 = vld [vmem:[%s5] sm:$0xf]
    %v245 = vld [vmem:[%s5 + $0x4] sm:$0xf]
    %v246 = vld [vmem:[%s5 + $0x8] sm:$0xf]
    %v247 = vld [vmem:[%s5 + $0xc] sm:$0xf]
    %v248 = vld [vmem:[%s5 + $0x10] sm:$0xf]
    %v249 = vld [vmem:[%s5 + $0x14] sm:$0xf]
    %v250 = vld [vmem:[%s5 + $0x18] sm:$0xf]
    %v251 = vld [vmem:[%s5 + $0x1c] sm:$0xf]
    %v252 = vld [vmem:[%s6] sm:$0x1]
    %v254 = vlaneseq
    %v255 = vshrl.u32 %v254, 7
    %v256 = vsub.s32 0, %v255
    %v257 = vrot.slane %v252, %v256
    %v267 = vunpack.c.l.b16 %v244
    %v268 = vunpack.c.l.b16 %v245
    %v269 = vunpack.c.l.b16 %v246
    %v270 = vunpack.c.l.b16 %v247
    %v271 = vunpack.c.l.b16 %v248
    %v272 = vunpack.c.l.b16 %v249
    %v273 = vunpack.c.l.b16 %v250
    %v274 = vunpack.c.l.b16 %v251
    %v275 = vpack.c.b16 %v268, %v267
    %v276 = vpack.c.b16 %v270, %v269
    %v277 = vpack.c.b16 %v272, %v271
    %v278 = vpack.c.b16 %v274, %v273
    %v284 = vsel %vm196, %v243, 0
    %286 = vmatprep.subr.bf16.mxu0 0
    %287 = vmatpush1.bf16.msra.mxu0 %v275
    %288 = vmatprep.subr.bf16.mxu0 0
    %289 = vmatpush1.bf16.msra.mxu0 %v276
    %290 = vmatprep.subr.bf16.mxu0 0
    %291 = vmatpush1.bf16.msra.mxu0 %v277
    %292 = vmatprep.subr.bf16.mxu0 0
    %293 = vmatpush1.bf16.msra.mxu0 %v278
    %294 = vmatprep.subr.bf16.mxu0 0
    %295 = vmatpush1.bf16.msra.mxu0 0
    %296 = vmatprep.subr.bf16.mxu0 0
    %297 = vmatpush1.bf16.msra.mxu0 0
    %298 = vmatprep.subr.bf16.mxu0 0
    %299 = vmatpush1.bf16.msra.mxu0 0
    %300 = vmatprep.subr.bf16.mxu0 0
    %301 = vmatpush1.bf16.msra.mxu0 0
    %302 = vmatprep.subr.bf16.mxu0 0
    %303 = vmatpush1.bf16.msra.mxu0 0
    %304 = vmatprep.subr.bf16.mxu0 0
    %305 = vmatpush1.bf16.msra.mxu0 0
    %306 = vmatprep.subr.bf16.mxu0 0
    %307 = vmatpush1.bf16.msra.mxu0 0
    %308 = vmatprep.subr.bf16.mxu0 0
    %309 = vmatpush1.bf16.msra.mxu0 0
    %310 = vmatprep.subr.bf16.mxu0 0
    %311 = vmatpush1.bf16.msra.mxu0 0
    %312 = vmatprep.subr.bf16.mxu0 0
    %313 = vmatpush1.bf16.msra.mxu0 0
    %314 = vmatprep.subr.bf16.mxu0 0
    %315 = vmatpush1.bf16.msra.mxu0 0
    %316 = vmatprep.subr.bf16.mxu0 0
    %317 = vmatpush1.bf16.msra.mxu0 0
    %318 = vmatprep.mubr.bf16.mxu0 0
    %319 = vmatmul.mubr.bf16.gmra.mrb[0].mxu0 %v284
    %v320 = vpop.f32.mrb[0].mxu0
    %v321 = vadd.f32 %v257, %v320
    %v322 = vpop.f32.mrb[0].mxu0
    %v323 = vpop.f32.mrb[0].mxu0
    %v324 = vadd.f32 %v257, %v323
    %v325 = vpop.f32.mrb[0].mxu0
    %326 = vdwg.mxu0
    %v327 = vsel %vm196, %v321, 0.0
    %328 = vadd.xlane.f32.xlu0 %v327
    %v329 = vpop.xlane.xlu0 %328
    %v330 = vsel %vm196, %v324, 0.0
    %331 = vadd.xlane.f32.xlu0 %v330
    %v332 = vpop.xlane.xlu0 %331
    %v333 = vrcp.pop 64.0
    %v334 = vmul.f32 %v329, %v333
    %v335 = vmul.f32 %v332, %v333
    %v336 = vsub.f32 %v321, %v334
    %v337 = vsub.f32 %v324, %v335
    %v338 = vmul.f32 %v336, %v336
    %v339 = vmul.f32 %v337, %v337
    %v340 = vsel %vm196, %v338, 0.0
    %341 = vadd.xlane.f32.xlu0 %v340
    %v342 = vpop.xlane.xlu0 %341
    %v343 = vsel %vm196, %v339, 0.0
    %344 = vadd.xlane.f32.xlu0 %v343
    %v345 = vpop.xlane.xlu0 %344
    %v346 = vmul.f32 %v342, %v333
    %v347 = vmul.f32 %v345, %v333
    %v348 = vadd.f32 %v346, 1e-05
    %v349 = vadd.f32 %v347, 1e-05
    %v350 = vrsqrt.pop %v348
    %v351 = vrsqrt.pop %v349
    %v352 = vmul.f32 %v336, %v350
    %v353 = vmul.f32 %v337, %v351
    %v354 = vld [vmem:[%s7] sm:$0x1]
    %v356 = vlaneseq
    %v357 = vshrl.u32 %v356, 7
    %v358 = vsub.s32 0, %v357
    %v359 = vrot.slane %v354, %v358
    %v361 = vmul.f32 %v352, %v359
    %v362 = vmul.f32 %v353, %v359
    %v363 = vld [vmem:[%s8] sm:$0x1]
    %v365 = vlaneseq
    %v366 = vshrl.u32 %v365, 7
    %v367 = vsub.s32 0, %v366
    %v368 = vrot.slane %v363, %v367
    %v370 = vadd.f32 %v361, %v368
    %v371 = vadd.f32 %v362, %v368
    %372 = vst.msk [vmem:[#allocation2] sm:$0xff] %vm196, %v370
    %373 = vst.msk [vmem:[#allocation2 + $0x8] sm:$0xff] %vm196, %v371
    // Predicated region
    $region38: #{tpu_custom_call.1} parent=1 // pred_check
      _
    $region39: #{tpu_custom_call.1} parent=1 // pred_check_branch
      %375 = sbr.rel (0) target = $region41
    $region40: #{tpu_custom_call.1} parent=1 // pred_region
      %s377 = ssub.s32 256, 256
      %378 = vsyncadd [#allocation3], %s377
      %s379 = sshll.u32 [#allocation2], 4
      %s380 = int_to_ptr.vmem [resolvable:$true] %s379
      %385 = dma.vmem_to_hbm [thread:$0]  %s380, 256, %s9, [#allocation3], 128, 128, 8
    $region41: #{tpu_custom_call.1} parent=1 // pred_fallthru
      _
    // Predicated region
    $region42: #{tpu_custom_call.1} parent=1 // pred_check
      _
    $region43: #{tpu_custom_call.1} parent=1 // pred_check_branch
      %387 = sbr.rel (0) target = $region45
    $region44: #{tpu_custom_call.1} parent=1 // pred_region
      %388 = dma.done [#allocation3], 256
    $region45: #{tpu_custom_call.1} parent=1 // pred_fallthru
      _
    %389 = vsyncpa [#allocation3], 1

</llo_original>
